<compile_context>
chip_gen: v6e
topology: v6e:2x2x1
jax: 0.10.0
libtpu: 0.0.40
codegen_flags: <defaults>
</compile_context>

<pallas_src>
import jax
import jax.numpy as jnp
from jax.experimental import pallas as pl
from jax.experimental.pallas import tpu as pltpu


def _round_up(n, m):
    return ((n + m - 1) // m) * m


def _make_mlp_kernel(num_hidden, matmul_dtype, approx_sigmoid):
    """Kernel ref order: x, (w, b) * num_hidden, w_last_row, b_last, out."""

    def kernel(*refs):
        x_ref = refs[0]
        o_ref = refs[-1]
        p = refs[1:-1]

        # x streams in as f32; cast to the MXU feed dtype on the VPU here
        # (hidden under DMA) rather than paying a separate wrapper cast pass.
        h = x_ref[...]
        for l in range(num_hidden):
            w_ref = p[2 * l]
            b_ref = p[2 * l + 1]
            y = jnp.dot(h.astype(matmul_dtype), w_ref[...].astype(matmul_dtype),
                        preferred_element_type=jnp.float32) + b_ref[...]
            h = jnp.maximum(y, 0.0)

        # Final H -> 1 layer on the VPU/XLU: broadcast multiply + lane reduction
        # (avoids a wasteful N=1 MXU matmul). Padded lanes of w_last are zeros,
        # so the reduction is exact.
        w_last = p[-2][...]                                        # (1, H_pad) f32
        b_last = p[-1][...]                                        # (1, 1)     f32
        z = jnp.sum(h * w_last, axis=-1, keepdims=True) + b_last   # (bt, 1)

        denom = 1.0 + jnp.exp(-z)
        if approx_sigmoid:
            sig = pl.reciprocal(denom, approx=True)                # EUP slot
        else:
            sig = 1.0 / denom                                      # exact divide

        # Lane-packed writeback: a (bt, 1) column -> 4 B/row of HBM traffic
        # (vs 512 B/row for a broadcast-to-128-lanes output block).
        o_ref[...] = sig

    return kernel


def neural_network_forward(x, params, *, batch_tile=512, fast_math=True):
    """Pallas forward for NeuralNetwork(input_size, clf_size in {'small','big'}).

    x:      [B, input_size] float32
    params: flat tuple (w1, b1, ..., wL, bL); w_i: [in, out] (transposed torch
            weight), b_i: [out] or [1, out]. Last layer must have out == 1.
    Returns [B, 1] float32 in (0, 1).
    """
    params = tuple(params)
    assert len(params) >= 4 and len(params) % 2 == 0
    ws = params[0::2]
    bs = params[1::2]
    num_hidden = len(ws) - 1
    assert ws[-1].shape[-1] == 1, "final layer must produce a single logit"

    B, in_dim = x.shape
    assert ws[0].shape[0] == in_dim

    LANE = 128
    matmul_dtype = jnp.bfloat16 if fast_math else jnp.float32

    # ---- zero-pad hidden dims to lane multiples (math unchanged: pads are 0) ----
    padded = []
    prev = in_dim
    for l in range(num_hidden):
        w = jnp.asarray(ws[l], jnp.float32)
        b = jnp.asarray(bs[l], jnp.float32).reshape(1, -1)
        out_dim = w.shape[1]
        out_pad = _round_up(out_dim, LANE)
        wp = jnp.pad(w, ((0, prev - w.shape[0]), (0, out_pad - out_dim)))
        bp = jnp.pad(b, ((0, 0), (0, out_pad - out_dim)))
        padded.append(wp.astype(matmul_dtype))   # bf16 weights in fast_math
        padded.append(bp)                        # bias stays f32 (added post-MXU)
        prev = out_pad

    # Final (H -> 1) layer as a padded row vector + scalar bias.
    w_last = jnp.asarray(ws[-1], jnp.float32).reshape(1, -1)       # (1, H)
    w_last = jnp.pad(w_last, ((0, 0), (0, prev - w_last.shape[1])))
    b_last = jnp.asarray(bs[-1], jnp.float32).reshape(1, 1)
    padded.append(w_last)
    padded.append(b_last)

    # ---- batch tiling: no input padding; Pallas clips the trailing partial block ----
    bt = _round_up(max(int(batch_tile), 128), 128)
    bt = min(bt, _round_up(max(B, 1), 128))
    if B >= 2 * LANE and pl.cdiv(B, bt) == 1:
        # Ensure >= 2 grid steps so dimension_semantics=("parallel",) can shard the
        # batch across both TensorCores on v7x; ~0.35 us extra on 1-TC v5e/v6e.
        bt = _round_up(pl.cdiv(B, 2), 128)
    n_tiles = pl.cdiv(B, bt)
    B_pad = n_tiles * bt

    x = jnp.asarray(x, jnp.float32)              # keep f32 in HBM; cast in-kernel

    kernel = _make_mlp_kernel(num_hidden, matmul_dtype, approx_sigmoid=fast_math)

    def resident(a):
        # Whole (small) parameter array as one block with a constant index_map:
        # stays VMEM resident across grid steps, no per-step re-DMA.
        return pl.BlockSpec(a.shape, lambda i: (0, 0))

    out = pl.pallas_call(
        kernel,
        out_shape=jax.ShapeDtypeStruct((B_pad, 1), jnp.float32),
        grid=(n_tiles,),
        in_specs=[pl.BlockSpec((bt, in_dim), lambda i: (i, 0))]
                 + [resident(a) for a in padded],
        out_specs=pl.BlockSpec((bt, 1), lambda i: (i, 0)),
        compiler_params=pltpu.CompilerParams(
            dimension_semantics=("parallel",),
        ),
    )(x, *padded)

    # Rows beyond B (trailing partial tile) are garbage and discarded here.
    return out[:B]


def init_params_small(input_size, key):
    """Deterministic init mimicking torch nn.Linear default U[-1/sqrt(fan_in), +1/sqrt(fan_in)]."""
    dims = [input_size, 250, 100, 10, 1]
    params = []
    for idx in range(len(dims) - 1):
        fan_in, fan_out = dims[idx], dims[idx + 1]
        key, kw, kb = jax.random.split(key, 3)
        bound = 1.0 / (fan_in ** 0.5)
        w = jax.random.uniform(kw, (fan_in, fan_out), jnp.float32, -bound, bound)
        b = jax.random.uniform(kb, (1, fan_out), jnp.float32, -bound, bound)
        params.extend([w, b])
    return tuple(params)


def reference_forward(x, params):
    """Plain-JAX reference for correctness checking."""
    w1, b1, w2, b2, w3, b3, w4, b4 = params
    h = jnp.maximum(x @ w1 + b1, 0.0)
    h = jnp.maximum(h @ w2 + b2, 0.0)
    h = jnp.maximum(h @ w3 + b3, 0.0)
    return jax.nn.sigmoid(h @ w4 + b4)


if __name__ == "__main__":
    key = jax.random.PRNGKey(0)
    key, kx = jax.random.split(key)

    batch = 8
    input_size = 32   # MIA feature-vector length fed to the classifier

    x = jax.random.normal(kx, (batch, input_size), dtype=jnp.float32)
    params = init_params_small(input_size, key)

    ref = reference_forward(x, params)

    # f32-operand path (exact sigmoid). Tolerance allows for MXU matmul rounding.
    out_exact = jax.block_until_ready(
        neural_network_forward(x, params, fast_math=False))
    assert out_exact.shape == (batch, 1)
    assert jnp.allclose(out_exact, ref, atol=1e-2, rtol=0.0), \
        "Pallas (f32) output mismatch vs reference"

    # Fast path (bf16 MXU inputs + EUP approx reciprocal) — loose tolerance.
    out_fast = jax.block_until_ready(
        neural_network_forward(x, params, fast_math=True))
    assert out_fast.shape == (batch, 1)
    assert jnp.allclose(out_fast, ref, atol=3e-2, rtol=0.0), \
        "Pallas (fast) output mismatch vs reference"

    print("KERNEL_OK")
</pallas_src>

<mosaic_0001>
module attributes {stable_mosaic.version = 11 : i64} {
  func.func @kernel(%arg0: i32, %arg1: memref<128x32xf32, #tpu.memory_space<vmem>>, %arg2: memref<32x256xf32, #tpu.memory_space<vmem>>, %arg3: memref<1x256xf32, #tpu.memory_space<vmem>>, %arg4: memref<256x128xf32, #tpu.memory_space<vmem>>, %arg5: memref<1x128xf32, #tpu.memory_space<vmem>>, %arg6: memref<128x128xf32, #tpu.memory_space<vmem>>, %arg7: memref<1x128xf32, #tpu.memory_space<vmem>>, %arg8: memref<1x128xf32, #tpu.memory_space<vmem>>, %arg9: memref<1x1xf32, #tpu.memory_space<vmem>>, %arg10: memref<128x1xf32, #tpu.memory_space<vmem>>) attributes {dimension_semantics = [#tpu.dimension_semantics<parallel>], iteration_bounds = array<i64: 1>, scalar_prefetch = 0 : i64, scratch_operands = 0 : i64, tpu.core_type = #tpu.core_type<tc>, window_params = [{transform_indices = @transform_0, window_bounds = array<i64: 128, 32>}, {pipeline_mode = #tpu.pipeline_mode<synchronous>, transform_indices = @transform_1, window_bounds = array<i64: 32, 256>}, {pipeline_mode = #tpu.pipeline_mode<synchronous>, transform_indices = @transform_2, window_bounds = array<i64: 1, 256>}, {pipeline_mode = #tpu.pipeline_mode<synchronous>, transform_indices = @transform_3, window_bounds = array<i64: 256, 128>}, {pipeline_mode = #tpu.pipeline_mode<synchronous>, transform_indices = @transform_4, window_bounds = array<i64: 1, 128>}, {pipeline_mode = #tpu.pipeline_mode<synchronous>, transform_indices = @transform_5, window_bounds = array<i64: 128, 128>}, {pipeline_mode = #tpu.pipeline_mode<synchronous>, transform_indices = @transform_6, window_bounds = array<i64: 1, 128>}, {pipeline_mode = #tpu.pipeline_mode<synchronous>, transform_indices = @transform_7, window_bounds = array<i64: 1, 128>}, {pipeline_mode = #tpu.pipeline_mode<synchronous>, transform_indices = @transform_8, window_bounds = array<i64: 1, 1>}, {transform_indices = @transform_9, window_bounds = array<i64: 128, 1>}]} {
    %c0 = arith.constant 0 : index
    %c0_0 = arith.constant 0 : index
    %0 = vector.load %arg1[%c0, %c0_0] : memref<128x32xf32, #tpu.memory_space<vmem>>, vector<128x32xf32>
    %c0_1 = arith.constant 0 : index
    %c0_2 = arith.constant 0 : index
    %1 = vector.load %arg2[%c0_1, %c0_2] : memref<32x256xf32, #tpu.memory_space<vmem>>, vector<32x256xf32>
    %cst = arith.constant dense<0.000000e+00> : vector<128x256xf32>
    %2 = tpu.matmul %0, %1, %cst {dimension_numbers = #tpu.dot_dimension_numbers<[1], [0], [0], [1], [0, 0, 1, 1], [], []>} : vector<128x32xf32>, vector<32x256xf32>, vector<128x256xf32> -> vector<128x256xf32>
    %c0_3 = arith.constant 0 : index
    %c0_4 = arith.constant 0 : index
    %3 = vector.load %arg3[%c0_3, %c0_4] : memref<1x256xf32, #tpu.memory_space<vmem>>, vector<1x256xf32>
    %4 = vector.broadcast %3 : vector<1x256xf32> to vector<128x256xf32>
    %5 = arith.addf %2, %4 : vector<128x256xf32>
    %cst_5 = arith.constant 0.000000e+00 : f32
    %6 = vector.broadcast %cst_5 : f32 to vector<128x256xf32>
    %7 = arith.maximumf %5, %6 : vector<128x256xf32>
    %c0_6 = arith.constant 0 : index
    %c0_7 = arith.constant 0 : index
    %8 = vector.load %arg4[%c0_6, %c0_7] : memref<256x128xf32, #tpu.memory_space<vmem>>, vector<256x128xf32>
    %cst_8 = arith.constant dense<0.000000e+00> : vector<128x128xf32>
    %9 = tpu.matmul %7, %8, %cst_8 {dimension_numbers = #tpu.dot_dimension_numbers<[1], [0], [0], [1], [0, 0, 1, 1], [], []>} : vector<128x256xf32>, vector<256x128xf32>, vector<128x128xf32> -> vector<128x128xf32>
    %c0_9 = arith.constant 0 : index
    %c0_10 = arith.constant 0 : index
    %10 = vector.load %arg5[%c0_9, %c0_10] : memref<1x128xf32, #tpu.memory_space<vmem>>, vector<1x128xf32>
    %11 = vector.broadcast %10 : vector<1x128xf32> to vector<128x128xf32>
    %12 = arith.addf %9, %11 : vector<128x128xf32>
    %cst_11 = arith.constant 0.000000e+00 : f32
    %13 = vector.broadcast %cst_11 : f32 to vector<128x128xf32>
    %14 = arith.maximumf %12, %13 : vector<128x128xf32>
    %c0_12 = arith.constant 0 : index
    %c0_13 = arith.constant 0 : index
    %15 = vector.load %arg6[%c0_12, %c0_13] : memref<128x128xf32, #tpu.memory_space<vmem>>, vector<128x128xf32>
    %cst_14 = arith.constant dense<0.000000e+00> : vector<128x128xf32>
    %16 = tpu.matmul %14, %15, %cst_14 {dimension_numbers = #tpu.dot_dimension_numbers<[1], [0], [0], [1], [0, 0, 1, 1], [], []>} : vector<128x128xf32>, vector<128x128xf32>, vector<128x128xf32> -> vector<128x128xf32>
    %c0_15 = arith.constant 0 : index
    %c0_16 = arith.constant 0 : index
    %17 = vector.load %arg7[%c0_15, %c0_16] : memref<1x128xf32, #tpu.memory_space<vmem>>, vector<1x128xf32>
    %18 = vector.broadcast %17 : vector<1x128xf32> to vector<128x128xf32>
    %19 = arith.addf %16, %18 : vector<128x128xf32>
    %cst_17 = arith.constant 0.000000e+00 : f32
    %20 = vector.broadcast %cst_17 : f32 to vector<128x128xf32>
    %21 = arith.maximumf %19, %20 : vector<128x128xf32>
    %c0_18 = arith.constant 0 : index
    %c0_19 = arith.constant 0 : index
    %22 = vector.load %arg8[%c0_18, %c0_19] : memref<1x128xf32, #tpu.memory_space<vmem>>, vector<1x128xf32>
    %c0_20 = arith.constant 0 : index
    %c0_21 = arith.constant 0 : index
    %23 = vector.load %arg9[%c0_20, %c0_21] : memref<1x1xf32, #tpu.memory_space<vmem>>, vector<1x1xf32>
    %24 = vector.broadcast %22 : vector<1x128xf32> to vector<128x128xf32>
    %25 = arith.mulf %21, %24 : vector<128x128xf32>
    %cst_22 = arith.constant dense<0.000000e+00> : vector<128xf32>
    %26 = vector.multi_reduction <add>, %25, %cst_22 [1] : vector<128x128xf32> to vector<128xf32>
    %27 = vector.shape_cast %26 : vector<128xf32> to vector<128x1xf32>
    %28 = vector.broadcast %23 : vector<1x1xf32> to vector<128x1xf32>
    %29 = arith.addf %27, %28 : vector<128x1xf32>
    %cst_23 = arith.constant 0.000000e+00 : f32
    %30 = vector.broadcast %cst_23 : f32 to vector<128x1xf32>
    %31 = arith.subf %30, %29 : vector<128x1xf32>
    %32 = math.exp %31 : vector<128x1xf32>
    %cst_24 = arith.constant 1.000000e+00 : f32
    %33 = vector.broadcast %cst_24 : f32 to vector<128x1xf32>
    %34 = arith.addf %33, %32 : vector<128x1xf32>
    %cst_25 = arith.constant 1.000000e+00 : f32
    %35 = vector.broadcast %cst_25 : f32 to vector<128x1xf32>
    %36 = arith.divf %35, %34 : vector<128x1xf32>
    %c0_26 = arith.constant 0 : index
    %c0_27 = arith.constant 0 : index
    %37 = vector.load %arg10[%c0_26, %c0_27] : memref<128x1xf32, #tpu.memory_space<vmem>>, vector<128x1xf32>
    tpu.vector_store %arg10[%c0_26, %c0_27], %36 {strides = array<i32>} : memref<128x1xf32, #tpu.memory_space<vmem>>, vector<128x1xf32>,
    return
  }
  func.func @transform_0(%arg0: i32) -> (i32, i32) {
    %c0_i32 = arith.constant 0 : i32
    %c0_i32_0 = arith.constant 0 : i32
    return %arg0, %c0_i32 : i32, i32
  }
  func.func @transform_1(%arg0: i32) -> (i32, i32) {
    %c0_i32 = arith.constant 0 : i32
    %c0_i32_0 = arith.constant 0 : i32
    %c0_i32_1 = arith.constant 0 : i32
    return %c0_i32, %c0_i32_0 : i32, i32
  }
  func.func @transform_2(%arg0: i32) -> (i32, i32) {
    %c0_i32 = arith.constant 0 : i32
    %c0_i32_0 = arith.constant 0 : i32
    %c0_i32_1 = arith.constant 0 : i32
    return %c0_i32, %c0_i32_0 : i32, i32
  }
  func.func @transform_3(%arg0: i32) -> (i32, i32) {
    %c0_i32 = arith.constant 0 : i32
    %c0_i32_0 = arith.constant 0 : i32
    %c0_i32_1 = arith.constant 0 : i32
    return %c0_i32, %c0_i32_0 : i32, i32
  }
  func.func @transform_4(%arg0: i32) -> (i32, i32) {
    %c0_i32 = arith.constant 0 : i32
    %c0_i32_0 = arith.constant 0 : i32
    %c0_i32_1 = arith.constant 0 : i32
    return %c0_i32, %c0_i32_0 : i32, i32
  }
  func.func @transform_5(%arg0: i32) -> (i32, i32) {
    %c0_i32 = arith.constant 0 : i32
    %c0_i32_0 = arith.constant 0 : i32
    %c0_i32_1 = arith.constant 0 : i32
    return %c0_i32, %c0_i32_0 : i32, i32
  }
  func.func @transform_6(%arg0: i32) -> (i32, i32) {
    %c0_i32 = arith.constant 0 : i32
    %c0_i32_0 = arith.constant 0 : i32
    %c0_i32_1 = arith.constant 0 : i32
    return %c0_i32, %c0_i32_0 : i32, i32
  }
  func.func @transform_7(%arg0: i32) -> (i32, i32) {
    %c0_i32 = arith.constant 0 : i32
    %c0_i32_0 = arith.constant 0 : i32
    %c0_i32_1 = arith.constant 0 : i32
    return %c0_i32, %c0_i32_0 : i32, i32
  }
  func.func @transform_8(%arg0: i32) -> (i32, i32) {
    %c0_i32 = arith.constant 0 : i32
    %c0_i32_0 = arith.constant 0 : i32
    %c0_i32_1 = arith.constant 0 : i32
    return %c0_i32, %c0_i32_0 : i32, i32
  }
  func.func @transform_9(%arg0: i32) -> (i32, i32) {
    %c0_i32 = arith.constant 0 : i32
    %c0_i32_0 = arith.constant 0 : i32
    return %arg0, %c0_i32 : i32, i32
  }
}

</mosaic_0001>

<llo_original>
// kernel: tpu_custom_call.1
$region0: #{tpu_custom_call.1}
  #allocation0 [shape = 'u32[]', space=smem, size = 0x4, offset = 0x4, fixed_abs, tag = 'smem constant byte address 0x4 - core index']
  #allocation1 [shape = 'u32[144,128]{1,0:T(1,128)}', space=vmem, size = 0x12000, scoped, tag = 'internal scratch']
  #allocation2 [shape = 'f32[1,1]{1,0:T(1,128)S(1)}', space=vmem, size = 0x200, scoped, tag = 'scoped memory for tpu_custom_call.1']
  %s0 = inlined_call_operand.hbm [shape: f32[8,32], index: 0, kind: input, shape index: {}]
  %s1 = inlined_call_operand.hbm [shape: f32[32,256], index: 1, kind: input, shape index: {}]
  %s2 = inlined_call_operand.vmem [shape: f32[1,256], index: 2, kind: input, shape index: {}]
  %s3 = inlined_call_operand.hbm [shape: f32[256,128], index: 3, kind: input, shape index: {}]
  %s4 = inlined_call_operand.vmem [shape: f32[1,128], index: 4, kind: input, shape index: {}]
  %s5 = inlined_call_operand.hbm [shape: f32[128,128], index: 5, kind: input, shape index: {}]
  %s6 = inlined_call_operand.vmem [shape: f32[1,128], index: 6, kind: input, shape index: {}]
  %s7 = inlined_call_operand.vmem [shape: f32[1,128], index: 7, kind: input, shape index: {}]
  %s8 = inlined_call_operand.<no memory space> [shape: f32[1,1], index: 8, kind: input, shape index: {}]
  %s9 = inlined_call_operand.vmem [shape: f32[128,1], index: 9, kind: output, shape index: {}]
  %s10 = sld [smem:[#allocation0]]
  $region62: #{tpu_custom_call.1} parent=0
    _
  %s12 = ssub.s32 1, %s10
  %s13 = scalar_select 0, %s12, %s10
  %v14 = vstv %s8
  %15 = vst [vmem:[#allocation2] sm:$0x1] %v14
  $region1: #{tpu_custom_call.1} parent=0
    #allocation3 [shape = 'u8[65536]{0}', space=vmem, size = 0x10000, scoped, tag = 'input window, operand 0, single buffered']
    #allocation4 [shape = 's32[1]{0}', space=sflag, size = 0x4, scoped, tag = 'scoped memory for tpu_custom_call.1']
    #allocation5 [shape = 'u8[32768]{0}', space=vmem, size = 0x8000, scoped, tag = 'input window, operand 1, single buffered']
    #allocation6 [shape = 's32[1]{0}', space=sflag, size = 0x4, scoped, tag = 'scoped memory for tpu_custom_call.1']
    #allocation7 [shape = 'u8[131072]{0}', space=vmem, size = 0x20000, scoped, tag = 'input window, operand 3, single buffered']
    #allocation8 [shape = 'u8[65536]{0}', space=vmem, size = 0x10000, scoped, tag = 'input window, operand 5, single buffered']
    #allocation9 [shape = 's32[1]{0}', space=sflag, size = 0x4, scoped, tag = 'scoped memory for tpu_custom_call.1']
    %16 = vsyncpa [#allocation4], 0
    %17 = vsyncpa [#allocation6], 0
    %18 = vsyncpa [#allocation9], 0
    // Predicated region
    $region2: #{tpu_custom_call.1} parent=1 // pred_check
      _
    $region3: #{tpu_custom_call.1} parent=1 // pred_check_branch
      %20 = sbr.rel (0) target = $region5
    $region4: #{tpu_custom_call.1} parent=1 // pred_region
      %s22 = ssub.s32 2048, 128
      %23 = vsyncadd [#allocation4], %s22
      %s24 = sshll.u32 [#allocation3], 4
      %s25 = int_to_ptr.vmem [resolvable:$true] %s24
      %30 = dma.hbm_to_vmem [thread:$0]  %s0, 128, %s25, [#allocation4], 128, 128, 8
    $region5: #{tpu_custom_call.1} parent=1 // pred_fallthru
      _
    // Predicated region
    $region6: #{tpu_custom_call.1} parent=1 // pred_check
      _
    $region7: #{tpu_custom_call.1} parent=1 // pred_check_branch
      %32 = sbr.rel (0) target = $region9
    $region8: #{tpu_custom_call.1} parent=1 // pred_region
      %s34 = ssub.s32 1024, 1024
      %35 = vsyncadd [#allocation6], %s34
      %s36 = sshll.u32 [#allocation5], 4
      %s37 = int_to_ptr.vmem [resolvable:$true] %s36
      %42 = dma.hbm_to_vmem [thread:$0]  %s1, 1024, %s37, [#allocation6], 256, 256, 16
    $region9: #{tpu_custom_call.1} parent=1 // pred_fallthru
      _
    // Predicated region
    $region10: #{tpu_custom_call.1} parent=1 // pred_check
      _
    $region11: #{tpu_custom_call.1} parent=1 // pred_check_branch
      %44 = sbr.rel (0) target = $region13
    $region12: #{tpu_custom_call.1} parent=1 // pred_region
      _
    $region13: #{tpu_custom_call.1} parent=1 // pred_fallthru
      _
    // Predicated region
    $region14: #{tpu_custom_call.1} parent=1 // pred_check
      _
    $region15: #{tpu_custom_call.1} parent=1 // pred_check_branch
      %46 = sbr.rel (0) target = $region17
    $region16: #{tpu_custom_call.1} parent=1 // pred_region
      %s48 = ssub.s32 4096, 4096
      %49 = vsyncadd [#allocation6], %s48
      %s50 = sshll.u32 [#allocation7], 4
      %s51 = int_to_ptr.vmem [resolvable:$true] %s50
      %56 = dma.hbm_to_vmem [thread:$0]  %s3, 4096, %s51, [#allocation6], 128, 128, 8
    $region17: #{tpu_custom_call.1} parent=1 // pred_fallthru
      _
    // Predicated region
    $region18: #{tpu_custom_call.1} parent=1 // pred_check
      _
    $region19: #{tpu_custom_call.1} parent=1 // pred_check_branch
      %58 = sbr.rel (0) target = $region21
    $region20: #{tpu_custom_call.1} parent=1 // pred_region
      _
    $region21: #{tpu_custom_call.1} parent=1 // pred_fallthru
      _
    // Predicated region
    $region22: #{tpu_custom_call.1} parent=1 // pred_check
      _
    $region23: #{tpu_custom_call.1} parent=1 // pred_check_branch
      %60 = sbr.rel (0) target = $region25
    $region24: #{tpu_custom_call.1} parent=1 // pred_region
      %s62 = ssub.s32 2048, 2048
      %63 = vsyncadd [#allocation9], %s62
      %s64 = sshll.u32 [#allocation8], 4
      %s65 = int_to_ptr.vmem [resolvable:$true] %s64
      %70 = dma.hbm_to_vmem [thread:$0]  %s5, 2048, %s65, [#allocation9], 128, 128, 8
    $region25: #{tpu_custom_call.1} parent=1 // pred_fallthru
      _
    // Predicated region
    $region26: #{tpu_custom_call.1} parent=1 // pred_check
      _
    $region27: #{tpu_custom_call.1} parent=1 // pred_check_branch
      %72 = sbr.rel (0) target = $region29
    $region28: #{tpu_custom_call.1} parent=1 // pred_region
      _
    $region29: #{tpu_custom_call.1} parent=1 // pred_fallthru
      _
    // Predicated region
    $region30: #{tpu_custom_call.1} parent=1 // pred_check
      _
    $region31: #{tpu_custom_call.1} parent=1 // pred_check_branch
      %74 = sbr.rel (0) target = $region33
    $region32: #{tpu_custom_call.1} parent=1 // pred_region
      _
    $region33: #{tpu_custom_call.1} parent=1 // pred_fallthru
      _
    // Predicated region
    $region34: #{tpu_custom_call.1} parent=1 // pred_check
      _
    $region35: #{tpu_custom_call.1} parent=1 // pred_check_branch
      %76 = sbr.rel (0) target = $region37
    $region36: #{tpu_custom_call.1} parent=1 // pred_region
      _
    $region37: #{tpu_custom_call.1} parent=1 // pred_fallthru
      _
    // Predicated region
    $region38: #{tpu_custom_call.1} parent=1 // pred_check
      _
    $region39: #{tpu_custom_call.1} parent=1 // pred_check_branch
      %78 = sbr.rel (0) target = $region41
    $region40: #{tpu_custom_call.1} parent=1 // pred_region
      %79 = dma.done [#allocation4], 2048
    $region41: #{tpu_custom_call.1} parent=1 // pred_fallthru
      _
    // Predicated region
    $region42: #{tpu_custom_call.1} parent=1 // pred_check
      _
    $region43: #{tpu_custom_call.1} parent=1 // pred_check_branch
      %81 = sbr.rel (0) target = $region45
    $region44: #{tpu_custom_call.1} parent=1 // pred_region
      %82 = dma.done [#allocation6], 1024
    $region45: #{tpu_custom_call.1} parent=1 // pred_fallthru
      _
    // Predicated region
    $region46: #{tpu_custom_call.1} parent=1 // pred_check
      _
    $region47: #{tpu_custom_call.1} parent=1 // pred_check_branch
      %84 = sbr.rel (0) target = $region49
    $region48: #{tpu_custom_call.1} parent=1 // pred_region
      %85 = dma.done [#allocation6], 4096
    $region49: #{tpu_custom_call.1} parent=1 // pred_fallthru
      _
    // Predicated region
    $region50: #{tpu_custom_call.1} parent=1 // pred_check
      _
    $region51: #{tpu_custom_call.1} parent=1 // pred_check_branch
      %87 = sbr.rel (0) target = $region53
    $region52: #{tpu_custom_call.1} parent=1 // pred_region
      %88 = dma.done [#allocation9], 2048
    $region53: #{tpu_custom_call.1} parent=1 // pred_fallthru
      _
    %v89 = vld [vmem:[#allocation3] sm:$0xff]
    %v90 = vld [vmem:[#allocation3 + $0x8] sm:$0xff]
    %v91 = vld [vmem:[#allocation3 + $0x10] sm:$0xff]
    %v92 = vld [vmem:[#allocation3 + $0x18] sm:$0xff]
    %v93 = vld [vmem:[#allocation3 + $0x20] sm:$0xff]
    %v94 = vld [vmem:[#allocation3 + $0x28] sm:$0xff]
    %v95 = vld [vmem:[#allocation3 + $0x30] sm:$0xff]
    %v96 = vld [vmem:[#allocation3 + $0x38] sm:$0xff]
    %v97 = vld [vmem:[#allocation3 + $0x40] sm:$0xff]
    %v98 = vld [vmem:[#allocation3 + $0x48] sm:$0xff]
    %v99 = vld [vmem:[#allocation3 + $0x50] sm:$0xff]
    %v100 = vld [vmem:[#allocation3 + $0x58] sm:$0xff]
    %v101 = vld [vmem:[#allocation3 + $0x60] sm:$0xff]
    %v102 = vld [vmem:[#allocation3 + $0x68] sm:$0xff]
    %v103 = vld [vmem:[#allocation3 + $0x70] sm:$0xff]
    %v104 = vld [vmem:[#allocation3 + $0x78] sm:$0xff]
    %v105 = vld [vmem:[#allocation5] sm:$0xff]
    %v106 = vld [vmem:[#allocation5 + $0x8] sm:$0xff]
    %v107 = vld [vmem:[#allocation5 + $0x10] sm:$0xff]
    %v108 = vld [vmem:[#allocation5 + $0x18] sm:$0xff]
    %v109 = vld [vmem:[#allocation5 + $0x20] sm:$0xff]
    %v110 = vld [vmem:[#allocation5 + $0x28] sm:$0xff]
    %v111 = vld [vmem:[#allocation5 + $0x30] sm:$0xff]
    %v112 = vld [vmem:[#allocation5 + $0x38] sm:$0xff]
    %v113 = vld [vmem:[%s2] sm:$0x3]
    %v115 = vlaneseq
    %v116 = vshrl.u32 %v115, 7
    %v117 = vsub.s32 0, %v116
    %v118 = vrot.slane %v113, %v117
    %v119 = vlaneseq
    %v120 = vshrl.u32 %v119, 7
    %v121 = vsub.s32 1, %v120
    %v122 = vrot.slane %v113, %v121
    %vm125 = vcmask 261120
    %v127 = vsel %vm125, %v89, 0
    %v130 = vsel %vm125, %v90, 0
    %v133 = vsel %vm125, %v91, 0
    %v136 = vsel %vm125, %v92, 0
    %v139 = vsel %vm125, %v93, 0
    %v142 = vsel %vm125, %v94, 0
    %v145 = vsel %vm125, %v95, 0
    %v148 = vsel %vm125, %v96, 0
    %v151 = vsel %vm125, %v97, 0
    %v154 = vsel %vm125, %v98, 0
    %v157 = vsel %vm125, %v99, 0
    %v160 = vsel %vm125, %v100, 0
    %v163 = vsel %vm125, %v101, 0
    %v166 = vsel %vm125, %v102, 0
    %v169 = vsel %vm125, %v103, 0
    %v172 = vsel %vm125, %v104, 0
    %174 = vmatprep.subr.mxu0 0.0
    %175 = vmatpush1.msra.mxu0 0.0
    %176 = vmatprep.subr.mxu0 0.0
    %177 = vmatpush1.msra.mxu0 0.0
    %178 = vmatprep.subr.mxu0 0.0
    %179 = vmatpush1.msra.mxu0 0.0
    %180 = vmatprep.subr.mxu0 0.0
    %181 = vmatpush1.msra.mxu0 0.0
    %182 = vmatprep.subr.mxu0 0.0
    %183 = vmatpush1.msra.mxu0 0.0
    %184 = vmatprep.subr.mxu0 0.0
    %185 = vmatpush1.msra.mxu0 0.0
    %186 = vmatprep.subr.mxu0 0.0
    %187 = vmatpush1.msra.mxu0 0.0
    %188 = vmatprep.subr.mxu0 0.0
    %189 = vmatpush1.msra.mxu0 0.0
    %190 = vmatprep.subr.mxu0 0.0
    %191 = vmatpush1.msra.mxu0 0.0
    %192 = vmatprep.subr.mxu0 0.0
    %193 = vmatpush1.msra.mxu0 0.0
    %194 = vmatprep.subr.mxu0 0.0
    %195 = vmatpush1.msra.mxu0 0.0
    %196 = vmatprep.subr.mxu0 0.0
    %197 = vmatpush1.msra.mxu0 0.0
    %198 = vmatprep.subr.mxu0 %v112
    %199 = vmatpush1.msra.mxu0 %v111
    %200 = vmatprep.subr.mxu0 %v110
    %201 = vmatpush1.msra.mxu0 %v109
    %202 = vmatprep.subr.mxu0 %v108
    %203 = vmatpush1.msra.mxu0 %v107
    %204 = vmatprep.subr.mxu0 %v106
    %205 = vmatpush1.msra.mxu0 %v105
    %206 = vmatprep.subr.mxu0 0.0
    %207 = vmatpush2.msra.mxu0 0.0
    %208 = vmatprep.subr.mxu0 0.0
    %209 = vmatpush2.msra.mxu0 0.0
    %210 = vmatprep.subr.mxu0 0.0
    %211 = vmatpush2.msra.mxu0 0.0
    %212 = vmatprep.subr.mxu0 0.0
    %213 = vmatpush2.msra.mxu0 0.0
    %214 = vmatprep.subr.mxu0 0.0
    %215 = vmatpush2.msra.mxu0 0.0
    %216 = vmatprep.subr.mxu0 0.0
    %217 = vmatpush2.msra.mxu0 0.0
    %218 = vmatprep.subr.mxu0 0.0
    %219 = vmatpush2.msra.mxu0 0.0
    %220 = vmatprep.subr.mxu0 0.0
    %221 = vmatpush2.msra.mxu0 0.0
    %222 = vmatprep.subr.mxu0 0.0
    %223 = vmatpush2.msra.mxu0 0.0
    %224 = vmatprep.subr.mxu0 0.0
    %225 = vmatpush2.msra.mxu0 0.0
    %226 = vmatprep.subr.mxu0 0.0
    %227 = vmatpush2.msra.mxu0 0.0
    %228 = vmatprep.subr.mxu0 0.0
    %229 = vmatpush2.msra.mxu0 0.0
    %230 = vmatprep.subr.mxu0 0.0
    %231 = vmatpush2.msra.mxu0 0.0
    %232 = vmatprep.subr.mxu0 0.0
    %233 = vmatpush2.msra.mxu0 0.0
    %234 = vmatprep.subr.mxu0 0.0
    %235 = vmatpush2.msra.mxu0 0.0
    %236 = vmatprep.subr.mxu0 0.0
    %237 = vmatpush2.msra.mxu0 0.0
    %238 = vmatprep.mubr.f32.mxu0 0.0
    %239 = vmatmul.mubr.f32.gmra.mxu0 %v127
    %v240 = vpop.f32.mrf.mxu0
    %v241 = vadd.f32 %v118, %v240
    %v242 = vpop.f32.mrf.mxu0
    %v243 = vadd.f32 %v122, %v242
    %244 = vmatprep.mubr.f32.mxu0 0.0
    %245 = vmatmul.mubr.f32.gmra.mxu0 %v130
    %v246 = vpop.f32.mrf.mxu0
    %v247 = vadd.f32 %v118, %v246
    %v248 = vpop.f32.mrf.mxu0
    %v249 = vadd.f32 %v122, %v248
    %250 = vmatprep.mubr.f32.mxu0 0.0
    %251 = vmatmul.mubr.f32.gmra.mxu0 %v133
    %v252 = vpop.f32.mrf.mxu0
    %v253 = vadd.f32 %v118, %v252
    %v254 = vpop.f32.mrf.mxu0
    %v255 = vadd.f32 %v122, %v254
    %256 = vmatprep.mubr.f32.mxu0 0.0
    %257 = vmatmul.mubr.f32.gmra.mxu0 %v136
    %v258 = vpop.f32.mrf.mxu0
    %v259 = vadd.f32 %v118, %v258
    %v260 = vpop.f32.mrf.mxu0
    %v261 = vadd.f32 %v122, %v260
    %262 = vmatprep.mubr.f32.mxu0 0.0
    %263 = vmatmul.mubr.f32.gmra.mxu0 %v139
    %v264 = vpop.f32.mrf.mxu0
    %v265 = vadd.f32 %v118, %v264
    %v266 = vpop.f32.mrf.mxu0
    %v267 = vadd.f32 %v122, %v266
    %268 = vmatprep.mubr.f32.mxu0 0.0
    %269 = vmatmul.mubr.f32.gmra.mxu0 %v142
    %v270 = vpop.f32.mrf.mxu0
    %v271 = vadd.f32 %v118, %v270
    %v272 = vpop.f32.mrf.mxu0
    %v273 = vadd.f32 %v122, %v272
    %274 = vmatprep.mubr.f32.mxu0 0.0
    %275 = vmatmul.mubr.f32.gmra.mxu0 %v145
    %v276 = vpop.f32.mrf.mxu0
    %v277 = vadd.f32 %v118, %v276
    %v278 = vpop.f32.mrf.mxu0
    %v279 = vadd.f32 %v122, %v278
    %280 = vmatprep.mubr.f32.mxu0 0.0
    %281 = vmatmul.mubr.f32.gmra.mxu0 %v148
    %v282 = vpop.f32.mrf.mxu0
    %v283 = vadd.f32 %v118, %v282
    %v284 = vpop.f32.mrf.mxu0
    %v285 = vadd.f32 %v122, %v284
    %286 = vmatprep.mubr.f32.mxu0 0.0
    %287 = vmatmul.mubr.f32.gmra.mxu0 %v151
    %v288 = vpop.f32.mrf.mxu0
    %v289 = vadd.f32 %v118, %v288
    %v290 = vpop.f32.mrf.mxu0
    %v291 = vadd.f32 %v122, %v290
    %292 = vmatprep.mubr.f32.mxu0 0.0
    %293 = vmatmul.mubr.f32.gmra.mxu0 %v154
    %v294 = vpop.f32.mrf.mxu0
    %v295 = vadd.f32 %v118, %v294
    %v296 = vpop.f32.mrf.mxu0
    %v297 = vadd.f32 %v122, %v296
    %298 = vmatprep.mubr.f32.mxu0 0.0
    %299 = vmatmul.mubr.f32.gmra.mxu0 %v157
    %v300 = vpop.f32.mrf.mxu0
    %v301 = vadd.f32 %v118, %v300
    %v302 = vpop.f32.mrf.mxu0
    %v303 = vadd.f32 %v122, %v302
    %304 = vmatprep.mubr.f32.mxu0 0.0
    %305 = vmatmul.mubr.f32.gmra.mxu0 %v160
    %v306 = vpop.f32.mrf.mxu0
    %v307 = vadd.f32 %v118, %v306
    %v308 = vpop.f32.mrf.mxu0
    %v309 = vadd.f32 %v122, %v308
    %310 = vmatprep.mubr.f32.mxu0 0.0
    %311 = vmatmul.mubr.f32.gmra.mxu0 %v163
    %v312 = vpop.f32.mrf.mxu0
    %v313 = vadd.f32 %v118, %v312
    %v314 = vpop.f32.mrf.mxu0
    %v315 = vadd.f32 %v122, %v314
    %316 = vmatprep.mubr.f32.mxu0 0.0
    %317 = vmatmul.mubr.f32.gmra.mxu0 %v166
    %v318 = vpop.f32.mrf.mxu0
    %v319 = vadd.f32 %v118, %v318
    %v320 = vpop.f32.mrf.mxu0
    %v321 = vadd.f32 %v122, %v320
    %322 = vmatprep.mubr.f32.mxu0 0.0
    %323 = vmatmul.mubr.f32.gmra.mxu0 %v169
    %v324 = vpop.f32.mrf.mxu0
    %v325 = vadd.f32 %v118, %v324
    %v326 = vpop.f32.mrf.mxu0
    %v327 = vadd.f32 %v122, %v326
    %328 = vmatprep.mubr.f32.mxu0 0.0
    %329 = vmatmul.mubr.f32.gmra.mxu0 %v172
    %v330 = vpop.f32.mrf.mxu0
    %v331 = vadd.f32 %v118, %v330
    %v332 = vpop.f32.mrf.mxu0
    %v333 = vadd.f32 %v122, %v332
    %334 = vdwg.mxu0
    %v335 = vmax.f32 %v241, 0.0
    %v336 = vmax.f32 %v243, 0.0
    %v337 = vmax.f32 %v247, 0.0
    %v338 = vmax.f32 %v249, 0.0
    %v339 = vmax.f32 %v253, 0.0
    %v340 = vmax.f32 %v255, 0.0
    %v341 = vmax.f32 %v259, 0.0
    %v342 = vmax.f32 %v261, 0.0
    %v343 = vmax.f32 %v265, 0.0
    %v344 = vmax.f32 %v267, 0.0
    %v345 = vmax.f32 %v271, 0.0
    %v346 = vmax.f32 %v273, 0.0
    %v347 = vmax.f32 %v277, 0.0
    %v348 = vmax.f32 %v279, 0.0
    %v349 = vmax.f32 %v283, 0.0
    %v350 = vmax.f32 %v285, 0.0
    %v351 = vmax.f32 %v289, 0.0
    %v352 = vmax.f32 %v291, 0.0
    %v353 = vmax.f32 %v295, 0.0
    %v354 = vmax.f32 %v297, 0.0
    %v355 = vmax.f32 %v301, 0.0
    %v356 = vmax.f32 %v303, 0.0
    %v357 = vmax.f32 %v307, 0.0
    %v358 = vmax.f32 %v309, 0.0
    %v359 = vmax.f32 %v313, 0.0
    %v360 = vmax.f32 %v315, 0.0
    %v361 = vmax.f32 %v319, 0.0
    %v362 = vmax.f32 %v321, 0.0
    %v363 = vmax.f32 %v325, 0.0
    %v364 = vmax.f32 %v327, 0.0
    %v365 = vmax.f32 %v331, 0.0
    %v366 = vmax.f32 %v333, 0.0
    %v367 = vld [vmem:[#allocation7] sm:$0xff]
    %v368 = vld [vmem:[#allocation7 + $0x8] sm:$0xff]
    %v369 = vld [vmem:[#allocation7 + $0x10] sm:$0xff]
    %v370 = vld [vmem:[#allocation7 + $0x18] sm:$0xff]
    %v371 = vld [vmem:[#allocation7 + $0x20] sm:$0xff]
    %v372 = vld [vmem:[#allocation7 + $0x28] sm:$0xff]
    %v373 = vld [vmem:[#allocation7 + $0x30] sm:$0xff]
    %v374 = vld [vmem:[#allocation7 + $0x38] sm:$0xff]
    %v375 = vld [vmem:[#allocation7 + $0x40] sm:$0xff]
    %v376 = vld [vmem:[#allocation7 + $0x48] sm:$0xff]
    %v377 = vld [vmem:[#allocation7 + $0x50] sm:$0xff]
    %v378 = vld [vmem:[#allocation7 + $0x58] sm:$0xff]
    %v379 = vld [vmem:[#allocation7 + $0x60] sm:$0xff]
    %v380 = vld [vmem:[#allocation7 + $0x68] sm:$0xff]
    %v381 = vld [vmem:[#allocation7 + $0x70] sm:$0xff]
    %v382 = vld [vmem:[#allocation7 + $0x78] sm:$0xff]
    %v383 = vld [vmem:[#allocation7 + $0x80] sm:$0xff]
    %v384 = vld [vmem:[#allocation7 + $0x88] sm:$0xff]
    %v385 = vld [vmem:[#allocation7 + $0x90] sm:$0xff]
    %v386 = vld [vmem:[#allocation7 + $0x98] sm:$0xff]
    %v387 = vld [vmem:[#allocation7 + $0xa0] sm:$0xff]
    %v388 = vld [vmem:[#allocation7 + $0xa8] sm:$0xff]
    %v389 = vld [vmem:[#allocation7 + $0xb0] sm:$0xff]
    %v390 = vld [vmem:[#allocation7 + $0xb8] sm:$0xff]
    %v391 = vld [vmem:[#allocation7 + $0xc0] sm:$0xff]
    %v392 = vld [vmem:[#allocation7 + $0xc8] sm:$0xff]
    %v393 = vld [vmem:[#allocation7 + $0xd0] sm:$0xff]
    %v394 = vld [vmem:[#allocation7 + $0xd8] sm:$0xff]
    %v395 = vld [vmem:[#allocation7 + $0xe0] sm:$0xff]
    %v396 = vld [vmem:[#allocation7 + $0xe8] sm:$0xff]
    %v397 = vld [vmem:[#allocation7 + $0xf0] sm:$0xff]
    %v398 = vld [vmem:[#allocation7 + $0xf8] sm:$0xff]
    %v399 = vld [vmem:[%s4] sm:$0x1]
    %v401 = vlaneseq
    %v402 = vshrl.u32 %v401, 7
    %v403 = vsub.s32 0, %v402
    %v404 = vrot.slane %v399, %v403
    %406 = vmatprep.subr.mxu0 0.0
    %407 = vmatpush1.msra.mxu0 %v382
    %408 = vmatprep.subr.mxu0 0.0
    %409 = vmatpush1.msra.mxu0 %v381
    %410 = vmatprep.subr.mxu0 0.0
    %411 = vmatpush1.msra.mxu0 %v380
    %412 = vmatprep.subr.mxu0 0.0
    %413 = vmatpush1.msra.mxu0 %v379
    %414 = vmatprep.subr.mxu0 0.0
    %415 = vmatpush1.msra.mxu0 %v378
    %416 = vmatprep.subr.mxu0 0.0
    %417 = vmatpush1.msra.mxu0 %v377
    %418 = vmatprep.subr.mxu0 0.0
    %419 = vmatpush1.msra.mxu0 %v376
    %420 = vmatprep.subr.mxu0 0.0
    %421 = vmatpush1.msra.mxu0 %v375
    %422 = vmatprep.subr.mxu0 0.0
    %423 = vmatpush1.msra.mxu0 %v374
    %424 = vmatprep.subr.mxu0 0.0
    %425 = vmatpush1.msra.mxu0 %v373
    %426 = vmatprep.subr.mxu0 0.0
    %427 = vmatpush1.msra.mxu0 %v372
    %428 = vmatprep.subr.mxu0 0.0
    %429 = vmatpush1.msra.mxu0 %v371
    %430 = vmatprep.subr.mxu0 0.0
    %431 = vmatpush1.msra.mxu0 %v370
    %432 = vmatprep.subr.mxu0 0.0
    %433 = vmatpush1.msra.mxu0 %v369
    %434 = vmatprep.subr.mxu0 0.0
    %435 = vmatpush1.msra.mxu0 %v368
    %436 = vmatprep.subr.mxu0 0.0
    %437 = vmatpush1.msra.mxu0 %v367
    %438 = vmatprep.subr.mxu0 0.0
    %439 = vmatpush2.msra.mxu0 %v398
    %440 = vmatprep.subr.mxu0 0.0
    %441 = vmatpush2.msra.mxu0 %v397
    %442 = vmatprep.subr.mxu0 0.0
    %443 = vmatpush2.msra.mxu0 %v396
    %444 = vmatprep.subr.mxu0 0.0
    %445 = vmatpush2.msra.mxu0 %v395
    %446 = vmatprep.subr.mxu0 0.0
    %447 = vmatpush2.msra.mxu0 %v394
    %448 = vmatprep.subr.mxu0 0.0
    %449 = vmatpush2.msra.mxu0 %v393
    %450 = vmatprep.subr.mxu0 0.0
    %451 = vmatpush2.msra.mxu0 %v392
    %452 = vmatprep.subr.mxu0 0.0
    %453 = vmatpush2.msra.mxu0 %v391
    %454 = vmatprep.subr.mxu0 0.0
    %455 = vmatpush2.msra.mxu0 %v390
    %456 = vmatprep.subr.mxu0 0.0
    %457 = vmatpush2.msra.mxu0 %v389
    %458 = vmatprep.subr.mxu0 0.0
    %459 = vmatpush2.msra.mxu0 %v388
    %460 = vmatprep.subr.mxu0 0.0
    %461 = vmatpush2.msra.mxu0 %v387
    %462 = vmatprep.subr.mxu0 0.0
    %463 = vmatpush2.msra.mxu0 %v386
    %464 = vmatprep.subr.mxu0 0.0
    %465 = vmatpush2.msra.mxu0 %v385
    %466 = vmatprep.subr.mxu0 0.0
    %467 = vmatpush2.msra.mxu0 %v384
    %468 = vmatprep.subr.mxu0 0.0
    %469 = vmatpush2.msra.mxu0 %v383
    %470 = vmatprep.mubr.f32.mxu0 %v336
    %471 = vmatmul.mubr.f32.gmra.mxu0 %v335
    %v472 = vpop.f32.mrf.mxu0
    %v473 = vadd.f32 %v404, %v472
    %v474 = vpop.f32.mrf.mxu0
    %475 = vmatprep.mubr.f32.mxu0 %v338
    %476 = vmatmul.mubr.f32.gmra.mxu0 %v337
    %v477 = vpop.f32.mrf.mxu0
    %v478 = vadd.f32 %v404, %v477
    %v479 = vpop.f32.mrf.mxu0
    %480 = vmatprep.mubr.f32.mxu0 %v340
    %481 = vmatmul.mubr.f32.gmra.mxu0 %v339
    %v482 = vpop.f32.mrf.mxu0
    %v483 = vadd.f32 %v404, %v482
    %v484 = vpop.f32.mrf.mxu0
    %485 = vmatprep.mubr.f32.mxu0 %v342
    %486 = vmatmul.mubr.f32.gmra.mxu0 %v341
    %v487 = vpop.f32.mrf.mxu0
    %v488 = vadd.f32 %v404, %v487
    %v489 = vpop.f32.mrf.mxu0
    %490 = vmatprep.mubr.f32.mxu0 %v344
    %491 = vmatmul.mubr.f32.gmra.mxu0 %v343
    %v492 = vpop.f32.mrf.mxu0
    %v493 = vadd.f32 %v404, %v492
    %v494 = vpop.f32.mrf.mxu0
    %495 = vmatprep.mubr.f32.mxu0 %v346
    %496 = vmatmul.mubr.f32.gmra.mxu0 %v345
    %v497 = vpop.f32.mrf.mxu0
    %v498 = vadd.f32 %v404, %v497
    %v499 = vpop.f32.mrf.mxu0
    %500 = vmatprep.mubr.f32.mxu0 %v348
    %501 = vmatmul.mubr.f32.gmra.mxu0 %v347
    %v502 = vpop.f32.mrf.mxu0
    %v503 = vadd.f32 %v404, %v502
    %v504 = vpop.f32.mrf.mxu0
    %505 = vmatprep.mubr.f32.mxu0 %v350
    %506 = vmatmul.mubr.f32.gmra.mxu0 %v349
    %v507 = vpop.f32.mrf.mxu0
    %v508 = vadd.f32 %v404, %v507
    %v509 = vpop.f32.mrf.mxu0
    %510 = vmatprep.mubr.f32.mxu0 %v352
    %511 = vmatmul.mubr.f32.gmra.mxu0 %v351
    %v512 = vpop.f32.mrf.mxu0
    %v513 = vadd.f32 %v404, %v512
    %v514 = vpop.f32.mrf.mxu0
    %515 = vmatprep.mubr.f32.mxu0 %v354
    %516 = vmatmul.mubr.f32.gmra.mxu0 %v353
    %v517 = vpop.f32.mrf.mxu0
    %v518 = vadd.f32 %v404, %v517
    %v519 = vpop.f32.mrf.mxu0
    %520 = vmatprep.mubr.f32.mxu0 %v356
    %521 = vmatmul.mubr.f32.gmra.mxu0 %v355
    %v522 = vpop.f32.mrf.mxu0
    %v523 = vadd.f32 %v404, %v522
    %v524 = vpop.f32.mrf.mxu0
    %525 = vmatprep.mubr.f32.mxu0 %v358
    %526 = vmatmul.mubr.f32.gmra.mxu0 %v357
    %v527 = vpop.f32.mrf.mxu0
    %v528 = vadd.f32 %v404, %v527
    %v529 = vpop.f32.mrf.mxu0
    %530 = vmatprep.mubr.f32.mxu0 %v360
    %531 = vmatmul.mubr.f32.gmra.mxu0 %v359
    %v532 = vpop.f32.mrf.mxu0
    %v533 = vadd.f32 %v404, %v532
    %v534 = vpop.f32.mrf.mxu0
    %535 = vmatprep.mubr.f32.mxu0 %v362
    %536 = vmatmul.mubr.f32.gmra.mxu0 %v361
    %v537 = vpop.f32.mrf.mxu0
    %v538 = vadd.f32 %v404, %v537
    %v539 = vpop.f32.mrf.mxu0
    %540 = vmatprep.mubr.f32.mxu0 %v364
    %541 = vmatmul.mubr.f32.gmra.mxu0 %v363
    %v542 = vpop.f32.mrf.mxu0
    %v543 = vadd.f32 %v404, %v542
    %v544 = vpop.f32.mrf.mxu0
    %545 = vmatprep.mubr.f32.mxu0 %v366
    %546 = vmatmul.mubr.f32.gmra.mxu0 %v365
    %v547 = vpop.f32.mrf.mxu0
    %v548 = vadd.f32 %v404, %v547
    %v549 = vpop.f32.mrf.mxu0
    %550 = vdwg.mxu0
    %v551 = vmax.f32 %v473, 0.0
    %v552 = vmax.f32 %v478, 0.0
    %v553 = vmax.f32 %v483, 0.0
    %v554 = vmax.f32 %v488, 0.0
    %v555 = vmax.f32 %v493, 0.0
    %v556 = vmax.f32 %v498, 0.0
    %v557 = vmax.f32 %v503, 0.0
    %v558 = vmax.f32 %v508, 0.0
    %v559 = vmax.f32 %v513, 0.0
    %v560 = vmax.f32 %v518, 0.0
    %v561 = vmax.f32 %v523, 0.0
    %v562 = vmax.f32 %v528, 0.0
    %v563 = vmax.f32 %v533, 0.0
    %v564 = vmax.f32 %v538, 0.0
    %v565 = vmax.f32 %v543, 0.0
    %v566 = vmax.f32 %v548, 0.0
    %v567 = vld [vmem:[#allocation8] sm:$0xff]
    %v568 = vld [vmem:[#allocation8 + $0x8] sm:$0xff]
    %v569 = vld [vmem:[#allocation8 + $0x10] sm:$0xff]
    %v570 = vld [vmem:[#allocation8 + $0x18] sm:$0xff]
    %v571 = vld [vmem:[#allocation8 + $0x20] sm:$0xff]
    %v572 = vld [vmem:[#allocation8 + $0x28] sm:$0xff]
    %v573 = vld [vmem:[#allocation8 + $0x30] sm:$0xff]
    %v574 = vld [vmem:[#allocation8 + $0x38] sm:$0xff]
    %v575 = vld [vmem:[#allocation8 + $0x40] sm:$0xff]
    %v576 = vld [vmem:[#allocation8 + $0x48] sm:$0xff]
    %v577 = vld [vmem:[#allocation8 + $0x50] sm:$0xff]
    %v578 = vld [vmem:[#allocation8 + $0x58] sm:$0xff]
    %v579 = vld [vmem:[#allocation8 + $0x60] sm:$0xff]
    %v580 = vld [vmem:[#allocation8 + $0x68] sm:$0xff]
    %v581 = vld [vmem:[#allocation8 + $0x70] sm:$0xff]
    %v582 = vld [vmem:[#allocation8 + $0x78] sm:$0xff]
    %v583 = vld [vmem:[%s6] sm:$0x1]
    %v585 = vlaneseq
    %v586 = vshrl.u32 %v585, 7
    %v587 = vsub.s32 0, %v586
    %v588 = vrot.slane %v583, %v587
    %590 = vmatprep.subr.mxu0 0.0
    %591 = vmatpush1.msra.mxu0 %v582
    %592 = vmatprep.subr.mxu0 0.0
    %593 = vmatpush1.msra.mxu0 %v581
    %594 = vmatprep.subr.mxu0 0.0
    %595 = vmatpush1.msra.mxu0 %v580
    %596 = vmatprep.subr.mxu0 0.0
    %597 = vmatpush1.msra.mxu0 %v579
    %598 = vmatprep.subr.mxu0 0.0
    %599 = vmatpush1.msra.mxu0 %v578
    %600 = vmatprep.subr.mxu0 0.0
    %601 = vmatpush1.msra.mxu0 %v577
    %602 = vmatprep.subr.mxu0 0.0
    %603 = vmatpush1.msra.mxu0 %v576
    %604 = vmatprep.subr.mxu0 0.0
    %605 = vmatpush1.msra.mxu0 %v575
    %606 = vmatprep.subr.mxu0 0.0
    %607 = vmatpush1.msra.mxu0 %v574
    %608 = vmatprep.subr.mxu0 0.0
    %609 = vmatpush1.msra.mxu0 %v573
    %610 = vmatprep.subr.mxu0 0.0
    %611 = vmatpush1.msra.mxu0 %v572
    %612 = vmatprep.subr.mxu0 0.0
    %613 = vmatpush1.msra.mxu0 %v571
    %614 = vmatprep.subr.mxu0 0.0
    %615 = vmatpush1.msra.mxu0 %v570
    %616 = vmatprep.subr.mxu0 0.0
    %617 = vmatpush1.msra.mxu0 %v569
    %618 = vmatprep.subr.mxu0 0.0
    %619 = vmatpush1.msra.mxu0 %v568
    %620 = vmatprep.subr.mxu0 0.0
    %621 = vmatpush1.msra.mxu0 %v567
    %622 = vmatprep.subr.mxu0 0.0
    %623 = vmatpush2.msra.mxu0 0.0
    %624 = vmatprep.subr.mxu0 0.0
    %625 = vmatpush2.msra.mxu0 0.0
    %626 = vmatprep.subr.mxu0 0.0
    %627 = vmatpush2.msra.mxu0 0.0
    %628 = vmatprep.subr.mxu0 0.0
    %629 = vmatpush2.msra.mxu0 0.0
    %630 = vmatprep.subr.mxu0 0.0
    %631 = vmatpush2.msra.mxu0 0.0
    %632 = vmatprep.subr.mxu0 0.0
    %633 = vmatpush2.msra.mxu0 0.0
    %634 = vmatprep.subr.mxu0 0.0
    %635 = vmatpush2.msra.mxu0 0.0
    %636 = vmatprep.subr.mxu0 0.0
    %637 = vmatpush2.msra.mxu0 0.0
    %638 = vmatprep.subr.mxu0 0.0
    %639 = vmatpush2.msra.mxu0 0.0
    %640 = vmatprep.subr.mxu0 0.0
    %641 = vmatpush2.msra.mxu0 0.0
    %642 = vmatprep.subr.mxu0 0.0
    %643 = vmatpush2.msra.mxu0 0.0
    %644 = vmatprep.subr.mxu0 0.0
    %645 = vmatpush2.msra.mxu0 0.0
    %646 = vmatprep.subr.mxu0 0.0
    %647 = vmatpush2.msra.mxu0 0.0
    %648 = vmatprep.subr.mxu0 0.0
    %649 = vmatpush2.msra.mxu0 0.0
    %650 = vmatprep.subr.mxu0 0.0
    %651 = vmatpush2.msra.mxu0 0.0
    %652 = vmatprep.subr.mxu0 0.0
    %653 = vmatpush2.msra.mxu0 0.0
    %654 = vmatprep.mubr.f32.mxu0 0.0
    %655 = vmatmul.mubr.f32.gmra.mxu0 %v551
    %v656 = vpop.f32.mrf.mxu0
    %v657 = vadd.f32 %v588, %v656
    %v658 = vpop.f32.mrf.mxu0
    %659 = vmatprep.mubr.f32.mxu0 0.0
    %660 = vmatmul.mubr.f32.gmra.mxu0 %v552
    %v661 = vpop.f32.mrf.mxu0
    %v662 = vadd.f32 %v588, %v661
    %v663 = vpop.f32.mrf.mxu0
    %664 = vmatprep.mubr.f32.mxu0 0.0
    %665 = vmatmul.mubr.f32.gmra.mxu0 %v553
    %v666 = vpop.f32.mrf.mxu0
    %v667 = vadd.f32 %v588, %v666
    %v668 = vpop.f32.mrf.mxu0
    %669 = vmatprep.mubr.f32.mxu0 0.0
    %670 = vmatmul.mubr.f32.gmra.mxu0 %v554
    %v671 = vpop.f32.mrf.mxu0
    %v672 = vadd.f32 %v588, %v671
    %v673 = vpop.f32.mrf.mxu0
    %674 = vmatprep.mubr.f32.mxu0 0.0
    %675 = vmatmul.mubr.f32.gmra.mxu0 %v555
    %v676 = vpop.f32.mrf.mxu0
    %v677 = vadd.f32 %v588, %v676
    %v678 = vpop.f32.mrf.mxu0
    %679 = vmatprep.mubr.f32.mxu0 0.0
    %680 = vmatmul.mubr.f32.gmra.mxu0 %v556
    %v681 = vpop.f32.mrf.mxu0
    %v682 = vadd.f32 %v588, %v681
    %v683 = vpop.f32.mrf.mxu0
    %684 = vmatprep.mubr.f32.mxu0 0.0
    %685 = vmatmul.mubr.f32.gmra.mxu0 %v557
    %v686 = vpop.f32.mrf.mxu0
    %v687 = vadd.f32 %v588, %v686
    %v688 = vpop.f32.mrf.mxu0
    %689 = vmatprep.mubr.f32.mxu0 0.0
    %690 = vmatmul.mubr.f32.gmra.mxu0 %v558
    %v691 = vpop.f32.mrf.mxu0
    %v692 = vadd.f32 %v588, %v691
    %v693 = vpop.f32.mrf.mxu0
    %694 = vmatprep.mubr.f32.mxu0 0.0
    %695 = vmatmul.mubr.f32.gmra.mxu0 %v559
    %v696 = vpop.f32.mrf.mxu0
    %v697 = vadd.f32 %v588, %v696
    %v698 = vpop.f32.mrf.mxu0
    %699 = vmatprep.mubr.f32.mxu0 0.0
    %700 = vmatmul.mubr.f32.gmra.mxu0 %v560
    %v701 = vpop.f32.mrf.mxu0
    %v702 = vadd.f32 %v588, %v701
    %v703 = vpop.f32.mrf.mxu0
    %704 = vmatprep.mubr.f32.mxu0 0.0
    %705 = vmatmul.mubr.f32.gmra.mxu0 %v561
    %v706 = vpop.f32.mrf.mxu0
    %v707 = vadd.f32 %v588, %v706
    %v708 = vpop.f32.mrf.mxu0
    %709 = vmatprep.mubr.f32.mxu0 0.0
    %710 = vmatmul.mubr.f32.gmra.mxu0 %v562
    %v711 = vpop.f32.mrf.mxu0
    %v712 = vadd.f32 %v588, %v711
    %v713 = vpop.f32.mrf.mxu0
    %714 = vmatprep.mubr.f32.mxu0 0.0
    %715 = vmatmul.mubr.f32.gmra.mxu0 %v563
    %v716 = vpop.f32.mrf.mxu0
    %v717 = vadd.f32 %v588, %v716
    %v718 = vpop.f32.mrf.mxu0
    %719 = vmatprep.mubr.f32.mxu0 0.0
    %720 = vmatmul.mubr.f32.gmra.mxu0 %v564
    %v721 = vpop.f32.mrf.mxu0
    %v722 = vadd.f32 %v588, %v721
    %v723 = vpop.f32.mrf.mxu0
    %724 = vmatprep.mubr.f32.mxu0 0.0
    %725 = vmatmul.mubr.f32.gmra.mxu0 %v565
    %v726 = vpop.f32.mrf.mxu0
    %v727 = vadd.f32 %v588, %v726
    %v728 = vpop.f32.mrf.mxu0
    %729 = vmatprep.mubr.f32.mxu0 0.0
    %730 = vmatmul.mubr.f32.gmra.mxu0 %v566
    %v731 = vpop.f32.mrf.mxu0
    %v732 = vadd.f32 %v588, %v731
    %v733 = vpop.f32.mrf.mxu0
    %734 = vdwg.mxu0
    %v735 = vmax.f32 %v657, 0.0
    %v736 = vmax.f32 %v662, 0.0
    %v737 = vmax.f32 %v667, 0.0
    %v738 = vmax.f32 %v672, 0.0
    %v739 = vmax.f32 %v677, 0.0
    %v740 = vmax.f32 %v682, 0.0
    %v741 = vmax.f32 %v687, 0.0
    %v742 = vmax.f32 %v692, 0.0
    %v743 = vmax.f32 %v697, 0.0
    %v744 = vmax.f32 %v702, 0.0
    %v745 = vmax.f32 %v707, 0.0
    %v746 = vmax.f32 %v712, 0.0
    %v747 = vmax.f32 %v717, 0.0
    %v748 = vmax.f32 %v722, 0.0
    %v749 = vmax.f32 %v727, 0.0
    %v750 = vmax.f32 %v732, 0.0
    %v751 = vld [vmem:[%s7] sm:$0x1]
    %v752 = vld [vmem:[#allocation2] sm:$0x1]
    %v754 = vlaneseq
    %v755 = vshrl.u32 %v754, 7
    %v756 = vsub.s32 0, %v755
    %v757 = vrot.slane %v751, %v756
    %v759 = vmul.f32 %v735, %v757
    %v760 = vmul.f32 %v736, %v757
    %v761 = vmul.f32 %v737, %v757
    %v762 = vmul.f32 %v738, %v757
    %v763 = vmul.f32 %v739, %v757
    %v764 = vmul.f32 %v740, %v757
    %v765 = vmul.f32 %v741, %v757
    %v766 = vmul.f32 %v742, %v757
    %v767 = vmul.f32 %v743, %v757
    %v768 = vmul.f32 %v744, %v757
    %v769 = vmul.f32 %v745, %v757
    %v770 = vmul.f32 %v746, %v757
    %v771 = vmul.f32 %v747, %v757
    %v772 = vmul.f32 %v748, %v757
    %v773 = vmul.f32 %v749, %v757
    %v774 = vmul.f32 %v750, %v757
    %775 = vadd.xlane.f32.xlu0 %v759
    %v776 = vpop.xlane.xlu0 %775
    %777 = vadd.xlane.f32.xlu0 %v760
    %v778 = vpop.xlane.xlu0 %777
    %779 = vadd.xlane.f32.xlu0 %v761
    %v780 = vpop.xlane.xlu0 %779
    %781 = vadd.xlane.f32.xlu0 %v762
    %v782 = vpop.xlane.xlu0 %781
    %783 = vadd.xlane.f32.xlu0 %v763
    %v784 = vpop.xlane.xlu0 %783
    %785 = vadd.xlane.f32.xlu0 %v764
    %v786 = vpop.xlane.xlu0 %785
    %787 = vadd.xlane.f32.xlu0 %v765
    %v788 = vpop.xlane.xlu0 %787
    %789 = vadd.xlane.f32.xlu0 %v766
    %v790 = vpop.xlane.xlu0 %789
    %791 = vadd.xlane.f32.xlu0 %v767
    %v792 = vpop.xlane.xlu0 %791
    %793 = vadd.xlane.f32.xlu0 %v768
    %v794 = vpop.xlane.xlu0 %793
    %795 = vadd.xlane.f32.xlu0 %v769
    %v796 = vpop.xlane.xlu0 %795
    %797 = vadd.xlane.f32.xlu0 %v770
    %v798 = vpop.xlane.xlu0 %797
    %799 = vadd.xlane.f32.xlu0 %v771
    %v800 = vpop.xlane.xlu0 %799
    %801 = vadd.xlane.f32.xlu0 %v772
    %v802 = vpop.xlane.xlu0 %801
    %803 = vadd.xlane.f32.xlu0 %v773
    %v804 = vpop.xlane.xlu0 %803
    %805 = vadd.xlane.f32.xlu0 %v774
    %v806 = vpop.xlane.xlu0 %805
    %v808 = vlaneseq
    %v809 = vshrl.u32 %v808, 7
    %v810 = vsub.s32 0, %v809
    %v811 = vrot.slane %v752, %v810
    %v813 = vadd.f32 %v776, %v811
    %v814 = vadd.f32 %v778, %v811
    %v815 = vadd.f32 %v780, %v811
    %v816 = vadd.f32 %v782, %v811
    %v817 = vadd.f32 %v784, %v811
    %v818 = vadd.f32 %v786, %v811
    %v819 = vadd.f32 %v788, %v811
    %v820 = vadd.f32 %v790, %v811
    %v821 = vadd.f32 %v792, %v811
    %v822 = vadd.f32 %v794, %v811
    %v823 = vadd.f32 %v796, %v811
    %v824 = vadd.f32 %v798, %v811
    %v825 = vadd.f32 %v800, %v811
    %v826 = vadd.f32 %v802, %v811
    %v827 = vadd.f32 %v804, %v811
    %v828 = vadd.f32 %v806, %v811
    %v829 = vsub.f32 0.0, %v813
    %v830 = vsub.f32 0.0, %v814
    %v831 = vsub.f32 0.0, %v815
    %v832 = vsub.f32 0.0, %v816
    %v833 = vsub.f32 0.0, %v817
    %v834 = vsub.f32 0.0, %v818
    %v835 = vsub.f32 0.0, %v819
    %v836 = vsub.f32 0.0, %v820
    %v837 = vsub.f32 0.0, %v821
    %v838 = vsub.f32 0.0, %v822
    %v839 = vsub.f32 0.0, %v823
    %v840 = vsub.f32 0.0, %v824
    %v841 = vsub.f32 0.0, %v825
    %v842 = vsub.f32 0.0, %v826
    %v843 = vsub.f32 0.0, %v827
    %v844 = vsub.f32 0.0, %v828
    %v845 = vmul.f32 %v829, 1.442695
    %v846 = vpow.pop %v845
    %v847 = vmul.f32 %v830, 1.442695
    %v848 = vpow.pop %v847
    %v849 = vmul.f32 %v831, 1.442695
    %v850 = vpow.pop %v849
    %v851 = vmul.f32 %v832, 1.442695
    %v852 = vpow.pop %v851
    %v853 = vmul.f32 %v833, 1.442695
    %v854 = vpow.pop %v853
    %v855 = vmul.f32 %v834, 1.442695
    %v856 = vpow.pop %v855
    %v857 = vmul.f32 %v835, 1.442695
    %v858 = vpow.pop %v857
    %v859 = vmul.f32 %v836, 1.442695
    %v860 = vpow.pop %v859
    %v861 = vmul.f32 %v837, 1.442695
    %v862 = vpow.pop %v861
    %v863 = vmul.f32 %v838, 1.442695
    %v864 = vpow.pop %v863
    %v865 = vmul.f32 %v839, 1.442695
    %v866 = vpow.pop %v865
    %v867 = vmul.f32 %v840, 1.442695
    %v868 = vpow.pop %v867
    %v869 = vmul.f32 %v841, 1.442695
    %v870 = vpow.pop %v869
    %v871 = vmul.f32 %v842, 1.442695
    %v872 = vpow.pop %v871
    %v873 = vmul.f32 %v843, 1.442695
    %v874 = vpow.pop %v873
    %v875 = vmul.f32 %v844, 1.442695
    %v876 = vpow.pop %v875
    %v877 = vadd.f32 %v846, 1.0
    %v878 = vadd.f32 %v848, 1.0
    %v879 = vadd.f32 %v850, 1.0
    %v880 = vadd.f32 %v852, 1.0
    %v881 = vadd.f32 %v854, 1.0
    %v882 = vadd.f32 %v856, 1.0
    %v883 = vadd.f32 %v858, 1.0
    %v884 = vadd.f32 %v860, 1.0
    %v885 = vadd.f32 %v862, 1.0
    %v886 = vadd.f32 %v864, 1.0
    %v887 = vadd.f32 %v866, 1.0
    %v888 = vadd.f32 %v868, 1.0
    %v889 = vadd.f32 %v870, 1.0
    %v890 = vadd.f32 %v872, 1.0
    %v891 = vadd.f32 %v874, 1.0
    %v892 = vadd.f32 %v876, 1.0
    %v893 = vrcp.pop %v877
    %v894 = vmul.f32 1.0, %v893
    %v895 = vrcp.pop %v878
    %v896 = vmul.f32 1.0, %v895
    %v897 = vrcp.pop %v879
    %v898 = vmul.f32 1.0, %v897
    %v899 = vrcp.pop %v880
    %v900 = vmul.f32 1.0, %v899
    %v901 = vrcp.pop %v881
    %v902 = vmul.f32 1.0, %v901
    %v903 = vrcp.pop %v882
    %v904 = vmul.f32 1.0, %v903
    %v905 = vrcp.pop %v883
    %v906 = vmul.f32 1.0, %v905
    %v907 = vrcp.pop %v884
    %v908 = vmul.f32 1.0, %v907
    %v909 = vrcp.pop %v885
    %v910 = vmul.f32 1.0, %v909
    %v911 = vrcp.pop %v886
    %v912 = vmul.f32 1.0, %v911
    %v913 = vrcp.pop %v887
    %v914 = vmul.f32 1.0, %v913
    %v915 = vrcp.pop %v888
    %v916 = vmul.f32 1.0, %v915
    %v917 = vrcp.pop %v889
    %v918 = vmul.f32 1.0, %v917
    %v919 = vrcp.pop %v890
    %v920 = vmul.f32 1.0, %v919
    %v921 = vrcp.pop %v891
    %v922 = vmul.f32 1.0, %v921
    %v923 = vrcp.pop %v892
    %v924 = vmul.f32 1.0, %v923
    %vm925 = vcmask 7168
    %926 = vst.msk [vmem:[%s9] sm:$0xff] %vm925, %v894
    %927 = vst.msk [vmem:[%s9 + $0x8] sm:$0xff] %vm925, %v896
    %928 = vst.msk [vmem:[%s9 + $0x10] sm:$0xff] %vm925, %v898
    %929 = vst.msk [vmem:[%s9 + $0x18] sm:$0xff] %vm925, %v900
    %930 = vst.msk [vmem:[%s9 + $0x20] sm:$0xff] %vm925, %v902
    %931 = vst.msk [vmem:[%s9 + $0x28] sm:$0xff] %vm925, %v904
    %932 = vst.msk [vmem:[%s9 + $0x30] sm:$0xff] %vm925, %v906
    %933 = vst.msk [vmem:[%s9 + $0x38] sm:$0xff] %vm925, %v908
    %934 = vst.msk [vmem:[%s9 + $0x40] sm:$0xff] %vm925, %v910
    %935 = vst.msk [vmem:[%s9 + $0x48] sm:$0xff] %vm925, %v912
    %936 = vst.msk [vmem:[%s9 + $0x50] sm:$0xff] %vm925, %v914
    %937 = vst.msk [vmem:[%s9 + $0x58] sm:$0xff] %vm925, %v916
    %938 = vst.msk [vmem:[%s9 + $0x60] sm:$0xff] %vm925, %v918
    %939 = vst.msk [vmem:[%s9 + $0x68] sm:$0xff] %vm925, %v920
    %940 = vst.msk [vmem:[%s9 + $0x70] sm:$0xff] %vm925, %v922
    %941 = vst.msk [vmem:[%s9 + $0x78] sm:$0xff] %vm925, %v924
    // Predicated region
    $region54: #{tpu_custom_call.1} parent=1 // pred_check
      _
    $region55: #{tpu_custom_call.1} parent=1 // pred_check_branch
      %943 = sbr.rel (0) target = $region57
    $region56: #{tpu_custom_call.1} parent=1 // pred_region
      _
    $region57: #{tpu_custom_call.1} parent=1 // pred_fallthru
      _
    // Predicated region
    $region58: #{tpu_custom_call.1} parent=1 // pred_check
      _
    $region59: #{tpu_custom_call.1} parent=1 // pred_check_branch
      %945 = sbr.rel (0) target = $region61
    $region60: #{tpu_custom_call.1} parent=1 // pred_region
      _
    $region61: #{tpu_custom_call.1} parent=1 // pred_fallthru
      _
    %946 = vsyncpa [#allocation4], 1
    %947 = vsyncpa [#allocation6], 1
    %948 = vsyncpa [#allocation9], 1

</llo_original>
